<compile_context>
chip_gen: v7x
topology: tpu7x:2x2x1
jax: 0.10.0
libtpu: 0.0.40
codegen_flags: <defaults>
</compile_context>

<pallas_src>
import functools

import jax
import jax.numpy as jnp
from jax.experimental import pallas as pl
from jax.experimental.pallas import tpu as pltpu


def _focal_kernel(x_ref, t_ref, out_ref, *, gamma, alpha):
    x = x_ref[...][0].astype(jnp.float32)       # (C, ROWS, 128)
    t = t_ref[...][0, 0]                        # (ROWS, 128) int32
    C, ROWS, _ = x.shape

    # log_softmax over the class axis, unrolled over the (small) class count:
    # every op below is a full-vreg (ROWS, 128) VPU/EUP op.
    m = x[0]
    for c in range(1, C):
        m = jnp.maximum(m, x[c])

    sum_exp = jnp.zeros_like(m)
    z_t = jnp.zeros_like(m)                     # z at the target class
    exp_t = jnp.zeros_like(m)                   # exp(z) at the target class
    for c in range(C):
        z_c = x[c] - m
        e_c = jnp.exp(z_c)
        sum_exp = sum_exp + e_c
        sel = t == c
        z_t = jnp.where(sel, z_c, z_t)
        exp_t = jnp.where(sel, e_c, exp_t)

    # alpha gather: at[s] = alpha[target[s]] via a scalar-operand select chain
    # (alpha entries are compile-time constants).  Pad lanes (t == -1) get 0.
    at = jnp.zeros_like(m)
    for c, a_c in enumerate(alpha):
        at = jnp.where(t == c, jnp.float32(a_c), at)

    lse = jnp.log(sum_exp)
    logpt = z_t - lse                           # log p_target
    pt = exp_t / sum_exp                        # reuse exp(z): no second exp

    one_minus_pt = 1.0 - pt
    g = float(gamma)
    if g.is_integer() and g >= 0.0:
        # Integer power -> pure VPU multiplies.
        focal = jnp.ones_like(one_minus_pt)
        for _ in range(int(g)):
            focal = focal * one_minus_pt
    else:
        # Clamp: pt can exceed 1 by a ulp; a negative base with fractional
        # gamma would be NaN.
        focal = jnp.maximum(one_minus_pt, 0.0) ** g

    loss = -focal * (logpt * at)                # (ROWS, 128); pad lanes are 0

    # Fold ROWS sublanes into one dense (8, 128) tile with full-vreg adds and
    # store it unmasked.
    part = jnp.sum(loss.reshape(ROWS // 8, 8, 128), axis=0)
    out_ref[...] = part.reshape(1, 1, 8, 128)


def _pick_rows_per_block(rows_total, C, itemsize):
    """Rows (of 128 lanes) per block, sized from a VMEM budget.

    Budget model: double-buffered logits + targets blocks plus a pessimistic
    (C + 12) full-size f32 temps for the in-kernel math, kept under ~20 MiB so
    the requested 32 MiB scoped-VMEM limit has headroom on every generation
    (v5e 128 MiB physical, v6e 128 MiB, v7x 64 MiB).
    """
    budget = 20 * 1024 * 1024
    best = 8
    cand = 8
    while cand <= 8192:
        io = 2 * (C * cand * 128 * itemsize + cand * 128 * 4)
        temps = (C + 12) * cand * 128 * 4
        if io + temps <= budget:
            best = cand
        cand *= 2
    # Balance the blocks so the last one is not mostly padding.
    num_rb = max(1, -(-rows_total // best))
    rows_per_block = -(-rows_total // num_rb)
    rows_per_block = ((rows_per_block + 7) // 8) * 8
    return rows_per_block, num_rb


def focal_loss(logits, target, *, gamma=2.0, alpha=0.25, size_average=True,
               loss_gain=1.0):
    """logits: (N, C, *spatial) float (or (M, C)); target: (N, *spatial) int."""
    assert logits.ndim == target.ndim + 1

    if logits.ndim == 2:
        # (M, C) rows -> (1, C, M).  Only this fallback path pays a transpose.
        x_ncs = logits.T[None]
        t_flat = target.reshape(1, -1).astype(jnp.int32)
    else:
        N_, C_ = logits.shape[0], logits.shape[1]
        x_ncs = logits.reshape(N_, C_, -1)          # native NC(S): no transpose
        t_flat = target.reshape(N_, -1).astype(jnp.int32)

    N, C, S = x_ncs.shape
    M = N * S                                       # element count pre-padding

    # Static alpha table, mirroring the PyTorch __init__ behavior.
    if isinstance(alpha, float):
        alpha_t = (float(alpha), 1.0 - float(alpha))
    elif isinstance(alpha, (list, tuple)):
        alpha_t = tuple(float(a) for a in alpha)
    else:
        alpha_t = tuple(float(a) for a in jnp.asarray(alpha).reshape(-1))
    if len(alpha_t) < C:
        raise ValueError(
            f"alpha table has {len(alpha_t)} entries but logits have {C} "
            "classes; PyTorch's alpha.gather would fail for such targets.")

    rows_total = -(-S // 128)
    rows_per_block, num_rb = _pick_rows_per_block(
        rows_total, C, x_ncs.dtype.itemsize)
    rows_padded = num_rb * rows_per_block
    s_pad = rows_padded * 128

    if s_pad != S:
        # Padded tail: pad targets with -1 => exactly zero loss contribution.
        x_ncs = jnp.pad(x_ncs, ((0, 0), (0, 0), (0, s_pad - S)))
        t_flat = jnp.pad(t_flat, ((0, 0), (0, s_pad - S)), constant_values=-1)

    x_blk = x_ncs.reshape(N, C, rows_padded, 128)
    t_blk = t_flat.reshape(N, 1, rows_padded, 128)

    kernel = functools.partial(_focal_kernel, gamma=gamma, alpha=alpha_t)

    partials = pl.pallas_call(
        kernel,
        out_shape=jax.ShapeDtypeStruct((N, num_rb, 8, 128), jnp.float32),
        grid_spec=pltpu.PrefetchScalarGridSpec(
            num_scalar_prefetch=0,
            grid=(N, num_rb),
            in_specs=[
                pl.BlockSpec((1, C, rows_per_block, 128),
                             lambda n, r: (n, 0, r, 0)),
                pl.BlockSpec((1, 1, rows_per_block, 128),
                             lambda n, r: (n, 0, r, 0)),
            ],
            out_specs=pl.BlockSpec((1, 1, 8, 128), lambda n, r: (n, r, 0, 0)),
        ),
        compiler_params=pltpu.CompilerParams(
            dimension_semantics=("parallel", "parallel"),
            vmem_limit_bytes=32 * 1024 * 1024),
    )(x_blk, t_blk)

    loss_sum = jnp.sum(partials)
    if size_average:
        return loss_gain * (loss_sum / M)
    return loss_gain * loss_sum


def _reference_focal_loss(logits, target, *, gamma=2.0, alpha=0.25,
                          size_average=True, loss_gain=1.0):
    N, C = logits.shape[0], logits.shape[1]
    x = logits.reshape(N, C, -1).transpose(0, 2, 1).reshape(-1, C)
    x = x.astype(jnp.float32)
    t = target.reshape(-1).astype(jnp.int32)
    logp = jax.nn.log_softmax(x, axis=1)
    logpt = jnp.take_along_axis(logp, t[:, None], axis=1)[:, 0]
    pt = jnp.exp(logpt)
    if isinstance(alpha, float):
        alpha_vec = jnp.array([alpha, 1.0 - alpha], dtype=jnp.float32)
    else:
        alpha_vec = jnp.asarray(alpha, dtype=jnp.float32)
    at = alpha_vec[t]
    loss = -1.0 * (1.0 - pt) ** gamma * (logpt * at)
    return loss_gain * (loss.mean() if size_average else loss.sum())


if __name__ == "__main__":
    key = jax.random.PRNGKey(0)
    k1, k2, k3, k4 = jax.random.split(key, 4)

    # Test 1: unet3d-style binary case (N, C, D, H, W) with the default
    # float alpha (2-entry table), mean reduction.
    N, C, D, H, W = 2, 2, 8, 16, 16
    logits = jax.random.normal(k1, (N, C, D, H, W), dtype=jnp.float32)
    target = jax.random.randint(k2, (N, D, H, W), 0, C, dtype=jnp.int32)

    out = focal_loss(logits, target, gamma=2.0, alpha=0.25,
                     size_average=True, loss_gain=1.0)
    out = jax.block_until_ready(out)
    ref = _reference_focal_loss(logits, target, gamma=2.0, alpha=0.25,
                                size_average=True, loss_gain=1.0)
    assert jnp.allclose(out, ref, rtol=1e-5, atol=1e-6), (out, ref)

    # Test 2: 3 classes, explicit alpha list, spatial size NOT divisible by
    # 128 (exercises the padded/masked tail), sum reduction + loss_gain.
    N2, C2, D2, H2, W2 = 2, 3, 5, 9, 11
    logits2 = jax.random.normal(k3, (N2, C2, D2, H2, W2), dtype=jnp.float32)
    target2 = jax.random.randint(k4, (N2, D2, H2, W2), 0, C2, dtype=jnp.int32)

    out2 = focal_loss(logits2, target2, gamma=2.0, alpha=[0.2, 0.3, 0.5],
                      size_average=False, loss_gain=2.0)
    out2 = jax.block_until_ready(out2)
    ref2 = _reference_focal_loss(logits2, target2, gamma=2.0,
                                 alpha=[0.2, 0.3, 0.5],
                                 size_average=False, loss_gain=2.0)
    assert jnp.allclose(out2, ref2, rtol=1e-5, atol=1e-6), (out2, ref2)

    print("KERNEL_OK")
</pallas_src>

<mosaic_0001>
module attributes {stable_mosaic.version = 11 : i64} {
  func.func @_focal_kernel(%arg0: i32, %arg1: i32, %arg2: memref<1x2x16x128xf32, #tpu.memory_space<vmem>>, %arg3: memref<1x1x16x128xi32, #tpu.memory_space<vmem>>, %arg4: memref<1x1x8x128xf32, #tpu.memory_space<vmem>>) attributes {dimension_semantics = [#tpu.dimension_semantics<parallel>, #tpu.dimension_semantics<parallel>], iteration_bounds = array<i64: 2, 1>, scalar_prefetch = 0 : i64, scratch_operands = 0 : i64, tpu.core_type = #tpu.core_type<tc>, window_params = [{transform_indices = @transform_0, window_bounds = array<i64: 1, 2, 16, 128>}, {transform_indices = @transform_1, window_bounds = array<i64: 1, 1, 16, 128>}, {transform_indices = @transform_2, window_bounds = array<i64: 1, 1, 8, 128>}]} {
    %c0 = arith.constant 0 : index
    %c0_0 = arith.constant 0 : index
    %c0_1 = arith.constant 0 : index
    %c0_2 = arith.constant 0 : index
    %0 = vector.load %arg2[%c0, %c0_0, %c0_1, %c0_2] : memref<1x2x16x128xf32, #tpu.memory_space<vmem>>, vector<1x2x16x128xf32>
    %1 = vector.shape_cast %0 : vector<1x2x16x128xf32> to vector<2x16x128xf32>
    %c0_3 = arith.constant 0 : index
    %c0_4 = arith.constant 0 : index
    %c0_5 = arith.constant 0 : index
    %c0_6 = arith.constant 0 : index
    %2 = vector.load %arg3[%c0_3, %c0_4, %c0_5, %c0_6] : memref<1x1x16x128xi32, #tpu.memory_space<vmem>>, vector<1x1x16x128xi32>
    %3 = vector.shape_cast %2 : vector<1x1x16x128xi32> to vector<16x128xi32>
    %4 = vector.extract_strided_slice %1 {offsets = [0, 0, 0], sizes = [1, 16, 128], strides = [1, 1, 1]} : vector<2x16x128xf32> to vector<1x16x128xf32>
    %5 = vector.shape_cast %4 : vector<1x16x128xf32> to vector<16x128xf32>
    %6 = vector.extract_strided_slice %1 {offsets = [1, 0, 0], sizes = [1, 16, 128], strides = [1, 1, 1]} : vector<2x16x128xf32> to vector<1x16x128xf32>
    %7 = vector.shape_cast %6 : vector<1x16x128xf32> to vector<16x128xf32>
    %8 = arith.maximumf %5, %7 : vector<16x128xf32>
    %cst = arith.constant 0.000000e+00 : f32
    %9 = vector.broadcast %cst : f32 to vector<16x128xf32>
    %cst_7 = arith.constant 0.000000e+00 : f32
    %10 = vector.broadcast %cst_7 : f32 to vector<16x128xf32>
    %cst_8 = arith.constant 0.000000e+00 : f32
    %11 = vector.broadcast %cst_8 : f32 to vector<16x128xf32>
    %12 = vector.extract_strided_slice %1 {offsets = [0, 0, 0], sizes = [1, 16, 128], strides = [1, 1, 1]} : vector<2x16x128xf32> to vector<1x16x128xf32>
    %13 = vector.shape_cast %12 : vector<1x16x128xf32> to vector<16x128xf32>
    %14 = arith.subf %13, %8 : vector<16x128xf32>
    %15 = math.exp %14 : vector<16x128xf32>
    %16 = arith.addf %9, %15 : vector<16x128xf32>
    %c0_i32 = arith.constant 0 : i32
    %17 = vector.broadcast %c0_i32 : i32 to vector<16x128xi32>
    %18 = arith.cmpi eq, %3, %17 : vector<16x128xi32>
    %19 = arith.select %18, %14, %10 : vector<16x128xi1>, vector<16x128xf32>
    %20 = arith.select %18, %15, %11 : vector<16x128xi1>, vector<16x128xf32>
    %21 = vector.extract_strided_slice %1 {offsets = [1, 0, 0], sizes = [1, 16, 128], strides = [1, 1, 1]} : vector<2x16x128xf32> to vector<1x16x128xf32>
    %22 = vector.shape_cast %21 : vector<1x16x128xf32> to vector<16x128xf32>
    %23 = arith.subf %22, %8 : vector<16x128xf32>
    %24 = math.exp %23 : vector<16x128xf32>
    %25 = arith.addf %16, %24 : vector<16x128xf32>
    %c1_i32 = arith.constant 1 : i32
    %26 = vector.broadcast %c1_i32 : i32 to vector<16x128xi32>
    %27 = arith.cmpi eq, %3, %26 : vector<16x128xi32>
    %28 = arith.select %27, %23, %19 : vector<16x128xi1>, vector<16x128xf32>
    %29 = arith.select %27, %24, %20 : vector<16x128xi1>, vector<16x128xf32>
    %cst_9 = arith.constant 0.000000e+00 : f32
    %30 = vector.broadcast %cst_9 : f32 to vector<16x128xf32>
    %c0_i32_10 = arith.constant 0 : i32
    %31 = vector.broadcast %c0_i32_10 : i32 to vector<16x128xi32>
    %32 = arith.cmpi eq, %3, %31 : vector<16x128xi32>
    %cst_11 = arith.constant 2.500000e-01 : f32
    %33 = vector.broadcast %cst_11 : f32 to vector<16x128xf32>
    %34 = arith.select %32, %33, %30 : vector<16x128xi1>, vector<16x128xf32>
    %c1_i32_12 = arith.constant 1 : i32
    %35 = vector.broadcast %c1_i32_12 : i32 to vector<16x128xi32>
    %36 = arith.cmpi eq, %3, %35 : vector<16x128xi32>
    %cst_13 = arith.constant 7.500000e-01 : f32
    %37 = vector.broadcast %cst_13 : f32 to vector<16x128xf32>
    %38 = arith.select %36, %37, %34 : vector<16x128xi1>, vector<16x128xf32>
    %39 = math.log %25 : vector<16x128xf32>
    %40 = arith.subf %28, %39 : vector<16x128xf32>
    %41 = arith.divf %29, %25 : vector<16x128xf32>
    %cst_14 = arith.constant 1.000000e+00 : f32
    %42 = vector.broadcast %cst_14 : f32 to vector<16x128xf32>
    %43 = arith.subf %42, %41 : vector<16x128xf32>
    %cst_15 = arith.constant 1.000000e+00 : f32
    %44 = vector.broadcast %cst_15 : f32 to vector<16x128xf32>
    %45 = arith.mulf %44, %43 : vector<16x128xf32>
    %46 = arith.mulf %45, %43 : vector<16x128xf32>
    %cst_16 = arith.constant 0.000000e+00 : f32
    %47 = vector.broadcast %cst_16 : f32 to vector<16x128xf32>
    %48 = arith.subf %47, %46 : vector<16x128xf32>
    %49 = arith.mulf %40, %38 : vector<16x128xf32>
    %50 = arith.mulf %48, %49 : vector<16x128xf32>
    %51 = vector.shape_cast %50 : vector<16x128xf32> to vector<2x8x128xf32>
    %cst_17 = arith.constant dense<0.000000e+00> : vector<8x128xf32>
    %52 = vector.multi_reduction <add>, %51, %cst_17 [0] : vector<2x8x128xf32> to vector<8x128xf32>
    %53 = vector.shape_cast %52 : vector<8x128xf32> to vector<1x1x8x128xf32>
    %c0_18 = arith.constant 0 : index
    %c0_19 = arith.constant 0 : index
    %c0_20 = arith.constant 0 : index
    %c0_21 = arith.constant 0 : index
    %54 = vector.load %arg4[%c0_18, %c0_19, %c0_20, %c0_21] : memref<1x1x8x128xf32, #tpu.memory_space<vmem>>, vector<1x1x8x128xf32>
    tpu.vector_store %arg4[%c0_18, %c0_19, %c0_20, %c0_21], %53 {strides = array<i32>} : memref<1x1x8x128xf32, #tpu.memory_space<vmem>>, vector<1x1x8x128xf32>,
    return
  }
  func.func @transform_0(%arg0: i32, %arg1: i32) -> (i32, i32, i32, i32) {
    %c0_i32 = arith.constant 0 : i32
    %c0_i32_0 = arith.constant 0 : i32
    %c0_i32_1 = arith.constant 0 : i32
    return %arg0, %c0_i32, %arg1, %c0_i32_0 : i32, i32, i32, i32
  }
  func.func @transform_1(%arg0: i32, %arg1: i32) -> (i32, i32, i32, i32) {
    %c0_i32 = arith.constant 0 : i32
    %c0_i32_0 = arith.constant 0 : i32
    %c0_i32_1 = arith.constant 0 : i32
    return %arg0, %c0_i32, %arg1, %c0_i32_0 : i32, i32, i32, i32
  }
  func.func @transform_2(%arg0: i32, %arg1: i32) -> (i32, i32, i32, i32) {
    %c0_i32 = arith.constant 0 : i32
    %c0_i32_0 = arith.constant 0 : i32
    %c0_i32_1 = arith.constant 0 : i32
    return %arg0, %arg1, %c0_i32, %c0_i32_0 : i32, i32, i32, i32
  }
}

</mosaic_0001>

<llo_original>
// kernel: tpu_custom_call.1
$region0: #{tpu_custom_call.1}
  #allocation0 [shape = 'u32[]', space=smem, size = 0x4, offset = 0x4, fixed_abs, tag = 'smem constant byte address 0x4 - core index']
  #allocation1 [shape = 'u32[144,128]{1,0:T(1,128)}', space=vmem, size = 0x12000, scoped, tag = 'internal scratch']
  %s0 = inlined_call_operand.hbm [shape: f32[2,2,16,128], index: 0, kind: input, shape index: {}]
  %s1 = inlined_call_operand.hbm [shape: s32[2,1,16,128], index: 1, kind: input, shape index: {}]
  %s2 = inlined_call_operand.hbm [shape: f32[2,1,8,128], index: 2, kind: output, shape index: {}]
  %s3 = sld [smem:[#allocation0]]
  $region49: #{tpu_custom_call.1} parent=0
    _
  %s5 = ssub.s32 1, %s3
  %s6 = scalar_select 0, %s5, %s3
  $region1: #{tpu_custom_call.1} parent=0
    #allocation2 [shape = 'u8[32768]{0}', space=vmem, size = 0x8000, scoped, tag = 'input window, operand 0']
    #allocation3 [shape = 's32[2]{0}', space=sflag, size = 0x8, scoped, tag = 'scoped memory for tpu_custom_call.1']
    #allocation4 [shape = 's32[2]{0}', space=sflag, size = 0x8, scoped, tag = 'scoped memory for tpu_custom_call.1']
    #allocation5 [shape = 'u8[16384]{0}', space=vmem, size = 0x4000, scoped, tag = 'input window, operand 1']
    #allocation6 [shape = 's32[2]{0}', space=sflag, size = 0x8, scoped, tag = 'scoped memory for tpu_custom_call.1']
    #allocation7 [shape = 'u8[8192]{0}', space=vmem, size = 0x2000, scoped, tag = 'output window, operand 0']
    %7 = vsyncpa [#allocation3], 0
    %s8 = scalar_lea.sflag [#allocation3], 1
    %9 = vsyncpa %s8, 0
    %10 = vsyncpa [#allocation6], 0
    %s11 = scalar_lea.sflag [#allocation6], 1
    %12 = vsyncpa %s11, 0
    %13 = vsyncpa [#allocation4], 0
    %s14 = scalar_lea.sflag [#allocation4], 1
    %15 = vsyncpa %s14, 0
    loop: start=0, step=1, limit=4
    $region2: #{tpu_custom_call.1} parent=1 // loop_pre_header
      _
    $region3: #{tpu_custom_call.1} parent=1 // loop_header
      %s17 = sphi 0, %s21
      %p18 = scmp.ge.s32.totalorder %s17, 4
      %s24 = sphi 0, %s36
      %s25 = sphi 0, %s32
      %s26 = sphi 0, %s24
      %s27 = sphi 0, %s25
      %s28 = sphi 0, %s26
      %s29 = sphi 0, %s27
      %s41 = sphi 0, %s43
      %s44 = sphi 0, %s41
      %s45 = sphi 0, %s44
      %s61 = sphi 0, %s45
      %s69 = sphi 0, %s71
      %s72 = sphi 0, %s69
      %s73 = sphi 0, %s72
      %s89 = sphi 0, %s73
      %s97 = sphi 0, %s99
      %s100 = sphi 0, %s97
      %s101 = sphi 0, %s100
      %s117 = sphi 0, %s101
    $region4: #{tpu_custom_call.1} parent=1 // loop_header_branch
      %20 = sbr.rel (%p18) target = $region8
    $region5: #{tpu_custom_call.1} parent=1 // loop_body
      %s22 = ssub.s32 %s17, 1
      %s23 = ssub.s32 %s17, 2
      %s30 = sadd.s32 1, %s25
      %p31 = scmp.ge.s32.totalorder %s30, 1
      %s32 = scalar_select %p31, 0, %s30
      %s33 = sadd.s32 1, %s24
      %s34 = scalar_select %p31, %s33, %s24
      %p35 = scmp.ge.s32.totalorder %s34, 2
      %s36 = scalar_select %p35, 0, %s34
      %s37 = ssub.s32 %s24, %s36
      %s38 = ssub.s32 %s25, %s32
      %s39 = sor.u32 %s37, %s38
      %p40 = scmp.eq.s32.totalorder %s39, 0
      %s42 = sadd.s32 %s41, 1
      %s43 = scalar_select %p40, %s41, %s42
      %p46 = pneg %p40
      %p47 = scmp.eq.s32.totalorder %s17, 1
      %p48 = por %p46, %p47
      %p49 = scmp.ne.s32.totalorder %s41, %s44
      %p50 = scmp.eq.s32.totalorder %s17, 0
      %p51 = por %p49, %p50
      %p52 = scmp.ne.s32.totalorder %s41, %s44
      %p53 = scmp.eq.s32.totalorder %s22, 1
      %p54 = por %p52, %p53
      %p55 = scmp.ne.s32.totalorder %s44, %s45
      %p56 = scmp.eq.s32.totalorder %s22, 0
      %p57 = por %p55, %p56
      %p58 = scmp.ne.s32.totalorder %s44, %s45
      %p59 = scmp.eq.s32.totalorder %s23, 1
      %p60 = por %p58, %p59
      %p62 = scmp.ne.s32.totalorder %s45, %s61
      %p63 = scmp.eq.s32.totalorder %s23, 0
      %p64 = por %p62, %p63
      %s65 = ssub.s32 %s24, %s36
      %s66 = ssub.s32 %s25, %s32
      %s67 = sor.u32 %s65, %s66
      %p68 = scmp.eq.s32.totalorder %s67, 0
      %s70 = sadd.s32 %s69, 1
      %s71 = scalar_select %p68, %s69, %s70
      %p74 = pneg %p68
      %p75 = scmp.eq.s32.totalorder %s17, 1
      %p76 = por %p74, %p75
      %p77 = scmp.ne.s32.totalorder %s69, %s72
      %p78 = scmp.eq.s32.totalorder %s17, 0
      %p79 = por %p77, %p78
      %p80 = scmp.ne.s32.totalorder %s69, %s72
      %p81 = scmp.eq.s32.totalorder %s22, 1
      %p82 = por %p80, %p81
      %p83 = scmp.ne.s32.totalorder %s72, %s73
      %p84 = scmp.eq.s32.totalorder %s22, 0
      %p85 = por %p83, %p84
      %p86 = scmp.ne.s32.totalorder %s72, %s73
      %p87 = scmp.eq.s32.totalorder %s23, 1
      %p88 = por %p86, %p87
      %p90 = scmp.ne.s32.totalorder %s73, %s89
      %p91 = scmp.eq.s32.totalorder %s23, 0
      %p92 = por %p90, %p91
      %s93 = ssub.s32 %s24, %s36
      %s94 = ssub.s32 %s25, %s32
      %s95 = sor.u32 %s93, %s94
      %p96 = scmp.eq.s32.totalorder %s95, 0
      %s98 = sadd.s32 %s97, 1
      %s99 = scalar_select %p96, %s97, %s98
      %p102 = pneg %p96
      %p103 = scmp.eq.s32.totalorder %s17, 1
      %p104 = por %p102, %p103
      %p105 = scmp.ne.s32.totalorder %s97, %s100
      %p106 = scmp.eq.s32.totalorder %s17, 0
      %p107 = por %p105, %p106
      %p108 = scmp.ne.s32.totalorder %s97, %s100
      %p109 = scmp.eq.s32.totalorder %s22, 1
      %p110 = por %p108, %p109
      %p111 = scmp.ne.s32.totalorder %s100, %s101
      %p112 = scmp.eq.s32.totalorder %s22, 0
      %p113 = por %p111, %p112
      %p114 = scmp.ne.s32.totalorder %s100, %s101
      %p115 = scmp.eq.s32.totalorder %s23, 1
      %p116 = por %p114, %p115
      %p118 = scmp.ne.s32.totalorder %s101, %s117
      %p119 = scmp.eq.s32.totalorder %s23, 0
      %p120 = por %p118, %p119
      %p121 = scmp.le.s32.totalorder 1, %s17
      %p122 = scmp.lt.s32.totalorder %s17, 3
      %p123 = pnand %p121, %p122
      %p124 = pneg %p123
      // Predicated region
      $region9: #{tpu_custom_call.1} parent=5 // pred_check
        _
      $region10: #{tpu_custom_call.1} parent=5 // pred_check_branch
        %126 = sbr.rel (%p123) target = $region12
      $region11: #{tpu_custom_call.1} parent=5 // pred_region
        %s127 = ssub.s32 %s17, 1
      $region12: #{tpu_custom_call.1} parent=5 // pred_fallthru
        _
      %p128 = scmp.lt.s32.totalorder %s17, 2
      // Predicated region
      $region13: #{tpu_custom_call.1} parent=5 // pred_check
        %p129 = pneg %p128
      $region14: #{tpu_custom_call.1} parent=5 // pred_check_branch
        %131 = sbr.rel (%p129) target = $region16
      $region15: #{tpu_custom_call.1} parent=5 // pred_region
        // Predicated region
        $region17: #{tpu_custom_call.1} parent=15 // pred_check
          %p132 = pneg %p51
        $region18: #{tpu_custom_call.1} parent=15 // pred_check_branch
          %134 = sbr.rel (%p132) target = $region20
        $region19: #{tpu_custom_call.1} parent=15 // pred_region
          %s135 = sand.u32 %s41, 1
          %s136 = scalar_lea.sflag [#allocation3], %s135
          %s137 = sand.u32 %s41, 1
          %s138 = smul.addr %s137, 32
          %s139 = scalar_lea.vmem [#allocation2], %s138
          %s140 = smul.u32 2, %s25
          %s142 = ssub.s32 512, 512
          %143 = vsyncadd %s136, %s142
          %s144 = smul.addr %s24, 4
          %s145 = sadd.s32 %s140, %s144
          %s146 = smul.addr %s145, 128
          %s147 = scalar_lea.hbm %s0, %s146
          %s148 = sshll.u32 %s139, 4
          %s149 = int_to_ptr.vmem [resolvable:$true] %s148
          %154 = dma.hbm_to_vmem [thread:$0]  %s147, 512, %s149, %s136, 128, 128, 8
        $region20: #{tpu_custom_call.1} parent=15 // pred_fallthru
          _
        // Predicated region
        $region21: #{tpu_custom_call.1} parent=15 // pred_check
          %p155 = pneg %p79
        $region22: #{tpu_custom_call.1} parent=15 // pred_check_branch
          %157 = sbr.rel (%p155) target = $region24
        $region23: #{tpu_custom_call.1} parent=15 // pred_region
          %s158 = sand.u32 %s69, 1
          %s159 = scalar_lea.sflag [#allocation6], %s158
          %s160 = sand.u32 %s69, 1
          %s161 = smul.addr %s160, 16
          %s162 = scalar_lea.vmem [#allocation5], %s161
          %s163 = smul.u32 2, %s25
          %s165 = ssub.s32 256, 256
          %166 = vsyncadd %s159, %s165
          %s167 = smul.addr %s24, 2
          %s168 = sadd.s32 %s163, %s167
          %s169 = smul.addr %s168, 128
          %s170 = scalar_lea.hbm %s1, %s169
          %s171 = sshll.u32 %s162, 4
          %s172 = int_to_ptr.vmem [resolvable:$true] %s171
          %177 = dma.hbm_to_vmem [thread:$0]  %s170, 256, %s172, %s159, 128, 128, 8
        $region24: #{tpu_custom_call.1} parent=15 // pred_fallthru
          _
      $region16: #{tpu_custom_call.1} parent=5 // pred_fallthru
        _
      %p178 = scmp.le.s32.totalorder 1, %s17
      %p179 = scmp.lt.s32.totalorder %s17, 3
      %p180 = pnand %p178, %p179
      %p181 = pneg %p180
      // Predicated region
      $region25: #{tpu_custom_call.1} parent=5 // pred_check
        _
      $region26: #{tpu_custom_call.1} parent=5 // pred_check_branch
        %183 = sbr.rel (%p180) target = $region28
      $region27: #{tpu_custom_call.1} parent=5 // pred_region
        %s184 = ssub.s32 %s17, 1
        %s185 = sand.u32 %s44, 1
        %s186 = scalar_lea.sflag [#allocation3], %s185
        %s187 = sand.u32 %s44, 1
        %s188 = smul.addr %s187, 32
        %s189 = scalar_lea.vmem [#allocation2], %s188
        // Predicated region
        $region29: #{tpu_custom_call.1} parent=27 // pred_check
          %p190 = pneg %p57
        $region30: #{tpu_custom_call.1} parent=27 // pred_check_branch
          %192 = sbr.rel (%p190) target = $region32
        $region31: #{tpu_custom_call.1} parent=27 // pred_region
          %193 = dma.done %s186, 512
        $region32: #{tpu_custom_call.1} parent=27 // pred_fallthru
          _
        %s194 = sand.u32 %s72, 1
        %s195 = scalar_lea.sflag [#allocation6], %s194
        %s196 = sand.u32 %s72, 1
        %s197 = smul.addr %s196, 16
        %s198 = scalar_lea.vmem [#allocation5], %s197
        // Predicated region
        $region33: #{tpu_custom_call.1} parent=27 // pred_check
          %p199 = pneg %p85
        $region34: #{tpu_custom_call.1} parent=27 // pred_check_branch
          %201 = sbr.rel (%p199) target = $region36
        $region35: #{tpu_custom_call.1} parent=27 // pred_region
          %202 = dma.done %s195, 256
        $region36: #{tpu_custom_call.1} parent=27 // pred_fallthru
          _
        %s203 = sand.u32 %s44, 1
        %s204 = scalar_lea.sflag [#allocation3], %s203
        %s205 = sand.u32 %s44, 1
        %s206 = smul.addr %s205, 32
        %s207 = scalar_lea.vmem [#allocation2], %s206
        %p208 = pneg %p57
        %p209 = pneg %p54
        %s210 = sand.u32 %s72, 1
        %s211 = scalar_lea.sflag [#allocation6], %s210
        %s212 = sand.u32 %s72, 1
        %s213 = smul.addr %s212, 16
        %s214 = scalar_lea.vmem [#allocation5], %s213
        %p215 = pneg %p85
        %p216 = pneg %p82
        %p217 = pneg %p113
        %p218 = pneg %p110
        %s219 = sand.u32 %s100, 1
        %s220 = scalar_lea.sflag [#allocation4], %s219
        %s221 = sand.u32 %s100, 1
        %s222 = smul.addr %s221, 8
        %s223 = scalar_lea.vmem [#allocation7], %s222
        %s224 = smul.u32 2, %s27
        %s225 = smul.u32 2, %s27
        %v226 = vld [vmem:[%s189] sm:$0xff]
        %v227 = vld [vmem:[%s189 + $0x8] sm:$0xff]
        %v228 = vld [vmem:[%s189 + $0x10] sm:$0xff]
        %v229 = vld [vmem:[%s189 + $0x18] sm:$0xff]
        %v230 = vld [vmem:[%s198] sm:$0xff]
        %v231 = vld [vmem:[%s198 + $0x8] sm:$0xff]
        %v232 = vmax.f32 %v226, %v228
        %v233 = vmax.f32 %v227, %v229
        %v234 = vsub.f32 %v226, %v232
        %v235 = vsub.f32 %v227, %v233
        %v236 = vmul.f32 %v234, 1.442695
        %v237 = vpow.pop %v236
        %v238 = vmul.f32 %v235, 1.442695
        %v239 = vpow.pop %v238
        %v240 = vadd.f32 %v237, 0.0
        %v241 = vadd.f32 %v239, 0.0
        %vm242 = vcmp.eq.s32.totalorder %v230, 0
        %vm243 = vcmp.eq.s32.totalorder %v231, 0
        %v244 = vsel %vm242, %v234, 0.0
        %v245 = vsel %vm243, %v235, 0.0
        %v246 = vsel %vm242, %v237, 0.0
        %v247 = vsel %vm243, %v239, 0.0
        %v248 = vsub.f32 %v228, %v232
        %v249 = vsub.f32 %v229, %v233
        %v250 = vmul.f32 %v248, 1.442695
        %v251 = vpow.pop %v250
        %v252 = vmul.f32 %v249, 1.442695
        %v253 = vpow.pop %v252
        %v254 = vadd.f32 %v240, %v251
        %v255 = vadd.f32 %v241, %v253
        %vm256 = vcmp.eq.s32.totalorder %v230, 1
        %vm257 = vcmp.eq.s32.totalorder %v231, 1
        %v258 = vsel %vm256, %v248, %v244
        %v259 = vsel %vm257, %v249, %v245
        %v260 = vsel %vm256, %v251, %v246
        %v261 = vsel %vm257, %v253, %v247
        %v262 = vsel %vm242, 0.25, 0.0
        %v263 = vsel %vm243, 0.25, 0.0
        %v264 = vsel %vm256, 0.75, %v262
        %v265 = vsel %vm257, 0.75, %v263
        %v266 = vlog2.pop %v254
        %v267 = vmul.f32 %v266, 0.6931472
        %v268 = vlog2.pop %v255
        %v269 = vmul.f32 %v268, 0.6931472
        %v270 = vsub.f32 %v258, %v267
        %v271 = vsub.f32 %v259, %v269
        %v272 = vrcp.pop %v254
        %v273 = vmul.f32 %v260, %v272
        %v274 = vrcp.pop %v255
        %v275 = vmul.f32 %v261, %v274
        %v276 = vsub.f32 1.0, %v273
        %v277 = vsub.f32 1.0, %v275
        %v278 = vmul.f32 %v276, %v276
        %v279 = vmul.f32 %v277, %v277
        %v280 = vsub.f32 0.0, %v278
        %v281 = vsub.f32 0.0, %v279
        %v282 = vmul.f32 %v270, %v264
        %v283 = vmul.f32 %v271, %v265
        %v284 = vmul.f32 %v280, %v282
        %v285 = vmul.f32 %v281, %v283
        %v286 = vadd.f32 %v284, %v285
        %287 = vst [vmem:[%s223] sm:$0xff] %v286
        %s288 = sand.u32 %s100, 1
        %s289 = scalar_lea.sflag [#allocation4], %s288
        %s290 = sand.u32 %s100, 1
        %s291 = smul.addr %s290, 8
        %s292 = scalar_lea.vmem [#allocation7], %s291
        // Predicated region
        $region37: #{tpu_custom_call.1} parent=27 // pred_check
          %p293 = pneg %p110
        $region38: #{tpu_custom_call.1} parent=27 // pred_check_branch
          %295 = sbr.rel (%p293) target = $region40
        $region39: #{tpu_custom_call.1} parent=27 // pred_region
          %s297 = ssub.s32 128, 128
          %298 = vsyncadd %s289, %s297
          %s299 = sadd.s32 %s27, %s26
          %s300 = smul.addr %s299, 128
          %s301 = scalar_lea.hbm %s2, %s300
          %s303 = sshll.u32 %s292, 4
          %s304 = int_to_ptr.vmem [resolvable:$true] %s303
          %306 = dma.vmem_to_hbm [thread:$0]  %s304, 128, %s301, %s289
        $region40: #{tpu_custom_call.1} parent=27 // pred_fallthru
          _
      $region28: #{tpu_custom_call.1} parent=5 // pred_fallthru
        _
      %p307 = scmp.le.s32.totalorder 2, %s17
      // Predicated region
      $region41: #{tpu_custom_call.1} parent=5 // pred_check
        %p308 = pneg %p307
      $region42: #{tpu_custom_call.1} parent=5 // pred_check_branch
        %310 = sbr.rel (%p308) target = $region44
      $region43: #{tpu_custom_call.1} parent=5 // pred_region
        %s311 = ssub.s32 %s17, 2
        // Predicated region
        $region45: #{tpu_custom_call.1} parent=43 // pred_check
          %p312 = pneg %p116
        $region46: #{tpu_custom_call.1} parent=43 // pred_check_branch
          %314 = sbr.rel (%p312) target = $region48
        $region47: #{tpu_custom_call.1} parent=43 // pred_region
          %s315 = sand.u32 %s101, 1
          %s316 = scalar_lea.sflag [#allocation4], %s315
          %s317 = sand.u32 %s101, 1
          %s318 = smul.addr %s317, 8
          %s319 = scalar_lea.vmem [#allocation7], %s318
          %320 = dma.done %s316, 128
        $region48: #{tpu_custom_call.1} parent=43 // pred_fallthru
          _
      $region44: #{tpu_custom_call.1} parent=5 // pred_fallthru
        _
    $region6: #{tpu_custom_call.1} parent=1 // loop_footer
      %s21 = sadd.s32 1, %s17
    $region7: #{tpu_custom_call.1} parent=1 // loop_footer_branch
      %16 = sbr.rel target = $region3
    $region8: #{tpu_custom_call.1} parent=1 // loop_exit
      _
    %321 = vsyncpa [#allocation3], 1
    %s322 = scalar_lea.sflag [#allocation3], 1
    %323 = vsyncpa %s322, 1
    %324 = vsyncpa [#allocation6], 1
    %s325 = scalar_lea.sflag [#allocation6], 1
    %326 = vsyncpa %s325, 1
    %327 = vsyncpa [#allocation4], 1
    %s328 = scalar_lea.sflag [#allocation4], 1
    %329 = vsyncpa %s328, 1

</llo_original>
